<compile_context>
chip_gen: v5e
topology: v5e:2x2
jax: 0.10.0
libtpu: 0.0.40
codegen_flags: <defaults>
</compile_context>

<pallas_src>
import functools

import jax
import jax.numpy as jnp
from jax.experimental import pallas as pl
from jax.experimental.pallas import tpu as pltpu


def _round_up(x, m):
    return ((x + m - 1) // m) * m


def _pad_to(x, target_shape):
    pads = [(0, t - s) for s, t in zip(x.shape, target_shape)]
    if not any(p[1] for p in pads):
        return x
    return jnp.pad(x, pads)


def _vmem_capacity_bytes():
    # Generation-aware VMEM capacity; conservative (v7x, 64 MiB) fallback.
    try:
        info = pltpu.get_tpu_info()
        cap = getattr(info, "vmem_capacity_bytes", None)
        if cap:
            return int(cap)
    except Exception:
        pass
    return 64 * 1024 * 1024


def _choose_tiling(B, S, D, cap):
    """Pick the batch tile TB and a vmem limit from the chip's VMEM capacity."""
    Dp = _round_up(D, 128)
    Qp = _round_up(2 * D, 128)
    # Resident weights/biases (Pallas still allocates two buffers for them).
    wts = 2 * (Qp * Dp + 2 * Dp * Dp + 3 * Dp) * 4
    # Per batch-row VMEM cost:
    #   bf16 context double buffer + two f32 128-lane chunk temporaries
    #   + f32 question/control/output double buffers.
    per_row = (2 * S * Dp * 2) + (2 * S * 128 * 4) + (2 * (Qp + 2 * Dp) * 4)
    budget = max(4 * 1024 * 1024, cap // 2 - wts)
    tb = max(8, (budget // per_row) // 8 * 8)
    tb = min(tb, max(8, _round_up(B, 8)), 1024)
    if cap < 100 * 1024 * 1024:
        # v7x (64 MiB VMEM, 2 TensorCores): keep >= 4 grid steps so the
        # "parallel" axis spans both cores and DMA still overlaps compute.
        tb = min(tb, max(8, _round_up(pl.cdiv(B, 4), 8)))
    est = tb * per_row + wts
    vmem_limit = int(min(cap * 85 // 100,
                         max(32 * 1024 * 1024, est + 16 * 1024 * 1024)))
    vmem_limit = max(vmem_limit, est + 4 * 1024 * 1024)
    return tb, vmem_limit


def control_unit_kernel(question_ref, control_ref, context_ref,
                        w_pos_ref, b_pos_ref,
                        w_cq_c_ref, w_cq_p_ref, b_cq_ref,
                        w_attn_ref,
                        out_ref):
    TB, S, Dp = context_ref.shape
    n_dc = Dp // 128

    # position_aware = question @ W_pos^T + b_pos                      [TB, Dp]  (MXU)
    pa = (jnp.dot(question_ref[...], w_pos_ref[...],
                  preferred_element_type=jnp.float32) + b_pos_ref[...])

    # control_question = cat([control, position_aware], 1) @ W_cq^T + b_cq
    # concat folded into two matmuls:                                  [TB, Dp]  (MXU)
    cq = (jnp.dot(control_ref[...], w_cq_c_ref[...],
                  preferred_element_type=jnp.float32)
          + jnp.dot(pa, w_cq_p_ref[...], preferred_element_type=jnp.float32)
          + b_cq_ref[...])

    # Fold the attention weight row into cq (b_attn dropped: softmax is
    # shift-invariant, so adding a scalar to every logit is a no-op).
    cqw = cq * w_attn_ref[...]                                         # [TB, Dp]

    # logits[b, s] = sum_d cqw[b, d] * ctx[b, s, d]
    # VPU multiply + lane-axis reduce, chunked over 128-lane blocks of Dp so the
    # [TB, S, Dp] f32 product never materializes in VMEM.              [TB, S]
    logits = jnp.zeros((TB, S), jnp.float32)
    for c in range(n_dc):
        sl = slice(c * 128, (c + 1) * 128)
        ctx_c = context_ref[:, :, sl].astype(jnp.float32)              # [TB, S, 128]
        logits = logits + jnp.sum(ctx_c * cqw[:, None, sl], axis=-1)

    # softmax over the sequence axis (last / lane axis of the 2-D logits)
    m = jnp.max(logits, axis=-1, keepdims=True)
    e = jnp.exp(logits - m)
    attn = e / jnp.sum(e, axis=-1, keepdims=True)                      # [TB, S]

    # next_control[b, d] = sum_s attn[b, s] * ctx[b, s, d]
    # VPU multiply + sublane reduce, same 128-lane chunking.           [TB, Dp]
    attn3 = attn[:, :, None]                                           # [TB, S, 1]
    for c in range(n_dc):
        sl = slice(c * 128, (c + 1) * 128)
        ctx_c = context_ref[:, :, sl].astype(jnp.float32)
        out_ref[:, sl] = jnp.sum(attn3 * ctx_c, axis=1).astype(out_ref.dtype)


def xavier_uniform(key, out_dim, in_dim):
    limit = jnp.sqrt(6.0 / (in_dim + out_dim))
    return jax.random.uniform(key, (out_dim, in_dim), jnp.float32, -limit, limit)


def init_control_unit_params(key, dim, max_step):
    keys = jax.random.split(key, max_step + 2)
    # nn.Linear stores weight as [out, in]; biases are zeroed (per linear()).
    w_pos = jnp.stack([xavier_uniform(keys[i], dim, 2 * dim)
                       for i in range(max_step)])          # [max_step, D, 2D]
    b_pos = jnp.zeros((max_step, dim), jnp.float32)
    w_cq = xavier_uniform(keys[max_step], dim, 2 * dim)    # [D, 2D]
    b_cq = jnp.zeros((dim,), jnp.float32)
    w_attn = xavier_uniform(keys[max_step + 1], 1, dim)    # [1, D]
    b_attn = jnp.zeros((1,), jnp.float32)
    return dict(w_pos=w_pos, b_pos=b_pos, w_cq=w_cq, b_cq=b_cq,
                w_attn=w_attn, b_attn=b_attn)


@functools.partial(jax.jit, static_argnames=("step",))
def control_unit_forward(step, context, question, control, params):
    B, S, D = context.shape
    Dp = _round_up(D, 128)          # lane-dense feature dim
    Qp = _round_up(2 * D, 128)      # lane-dense question feature dim
    cap = _vmem_capacity_bytes()
    TB, vmem_limit = _choose_tiling(B, S, D, cap)
    Bp = _round_up(B, TB)

    # Glue: select the step-specific linear, pre-transpose weights to [in, out],
    # and zero-pad everything to lane-dense padded shapes (exact math).
    w_pos_t = _pad_to(params["w_pos"][step].T, (Qp, Dp))             # [Qp, Dp]
    b_pos = _pad_to(params["b_pos"][step].reshape(1, D), (1, Dp))    # [1, Dp]
    w_cq_t = params["w_cq"].T                                        # [2D, D]
    w_cq_c = _pad_to(w_cq_t[:D, :], (Dp, Dp))                        # control half
    w_cq_p = _pad_to(w_cq_t[D:, :], (Dp, Dp))                        # pos-aware half
    b_cq = _pad_to(params["b_cq"].reshape(1, D), (1, Dp))            # [1, Dp]
    w_attn = _pad_to(params["w_attn"].reshape(1, D), (1, Dp))        # [1, Dp]
    # b_attn intentionally dropped: shift-invariant under softmax.

    q_p = _pad_to(question, (Bp, Qp))                                # f32
    ctrl_p = _pad_to(control, (Bp, Dp))                              # f32
    ctx_p = _pad_to(context, (Bp, S, Dp)).astype(jnp.bfloat16)       # bf16 stream
    # NOTE: S is never padded here; if it ever is, the padded logits must be
    # masked to -inf before the softmax (zero-padded context is not enough).

    out_p = pl.pallas_call(
        control_unit_kernel,
        out_shape=jax.ShapeDtypeStruct((Bp, Dp), jnp.float32),
        grid=(Bp // TB,),
        in_specs=[
            pl.BlockSpec((TB, Qp), lambda i: (i, 0)),        # question tile
            pl.BlockSpec((TB, Dp), lambda i: (i, 0)),        # control tile
            pl.BlockSpec((TB, S, Dp), lambda i: (i, 0, 0)),  # context tile (bf16)
            pl.BlockSpec((Qp, Dp), lambda i: (0, 0)),        # W_pos[step]^T (resident)
            pl.BlockSpec((1, Dp), lambda i: (0, 0)),         # b_pos[step]
            pl.BlockSpec((Dp, Dp), lambda i: (0, 0)),        # W_cq^T (control half)
            pl.BlockSpec((Dp, Dp), lambda i: (0, 0)),        # W_cq^T (pos-aware half)
            pl.BlockSpec((1, Dp), lambda i: (0, 0)),         # b_cq
            pl.BlockSpec((1, Dp), lambda i: (0, 0)),         # W_attn row
        ],
        out_specs=pl.BlockSpec((TB, Dp), lambda i: (i, 0)),  # 2-D lane-dense output
        compiler_params=pltpu.CompilerParams(
            dimension_semantics=("parallel",),
            vmem_limit_bytes=vmem_limit),
    )(q_p, ctrl_p, ctx_p, w_pos_t, b_pos, w_cq_c, w_cq_p, b_cq, w_attn)

    return out_p[:B, :D]


def control_unit_reference(step, context, question, control, params):
    # pure-JAX f32 reference of the PyTorch forward
    pa = question @ params["w_pos"][step].T + params["b_pos"][step]
    cq = jnp.concatenate([control, pa], axis=1) @ params["w_cq"].T + params["b_cq"]
    prod = cq[:, None, :] * context
    logits = prod @ params["w_attn"].T + params["b_attn"]          # [B, S, 1]
    attn = jax.nn.softmax(logits, axis=1)
    return jnp.sum(attn * context, axis=1)


if __name__ == "__main__":
    B, S, D, MAX_STEP = 2, 8, 32, 4
    step = 1

    key = jax.random.PRNGKey(0)
    k_ctx, k_q, k_ctrl, k_params = jax.random.split(key, 4)

    context = jax.random.normal(k_ctx, (B, S, D), jnp.float32)
    question = jax.random.normal(k_q, (B, 2 * D), jnp.float32)
    control = jax.random.normal(k_ctrl, (B, D), jnp.float32)
    params = init_control_unit_params(k_params, D, MAX_STEP)

    out = control_unit_forward(step, context, question, control, params)
    out = jax.block_until_ready(out)

    ref = control_unit_reference(step, context, question, control, params)
    assert out.shape == (B, D)
    # tolerance accounts for bf16 context streaming (f32 accumulation in-kernel)
    assert jnp.allclose(out, ref, atol=2e-2, rtol=2e-2), \
        f"max abs err {jnp.max(jnp.abs(out - ref))}"

    print("KERNEL_OK")
</pallas_src>

<mosaic_0001>
module attributes {stable_mosaic.version = 11 : i64} {
  func.func @control_unit_kernel(%arg0: i32, %arg1: memref<8x128xf32, #tpu.memory_space<vmem>>, %arg2: memref<8x128xf32, #tpu.memory_space<vmem>>, %arg3: memref<8x8x128xbf16, #tpu.memory_space<vmem>>, %arg4: memref<128x128xf32, #tpu.memory_space<vmem>>, %arg5: memref<1x128xf32, #tpu.memory_space<vmem>>, %arg6: memref<128x128xf32, #tpu.memory_space<vmem>>, %arg7: memref<128x128xf32, #tpu.memory_space<vmem>>, %arg8: memref<1x128xf32, #tpu.memory_space<vmem>>, %arg9: memref<1x128xf32, #tpu.memory_space<vmem>>, %arg10: memref<8x128xf32, #tpu.memory_space<vmem>>) attributes {dimension_semantics = [#tpu.dimension_semantics<parallel>], iteration_bounds = array<i64: 1>, scalar_prefetch = 0 : i64, scratch_operands = 0 : i64, tpu.core_type = #tpu.core_type<tc>, window_params = [{transform_indices = @transform_0, window_bounds = array<i64: 8, 128>}, {transform_indices = @transform_1, window_bounds = array<i64: 8, 128>}, {transform_indices = @transform_2, window_bounds = array<i64: 8, 8, 128>}, {pipeline_mode = #tpu.pipeline_mode<synchronous>, transform_indices = @transform_3, window_bounds = array<i64: 128, 128>}, {pipeline_mode = #tpu.pipeline_mode<synchronous>, transform_indices = @transform_4, window_bounds = array<i64: 1, 128>}, {pipeline_mode = #tpu.pipeline_mode<synchronous>, transform_indices = @transform_5, window_bounds = array<i64: 128, 128>}, {pipeline_mode = #tpu.pipeline_mode<synchronous>, transform_indices = @transform_6, window_bounds = array<i64: 128, 128>}, {pipeline_mode = #tpu.pipeline_mode<synchronous>, transform_indices = @transform_7, window_bounds = array<i64: 1, 128>}, {pipeline_mode = #tpu.pipeline_mode<synchronous>, transform_indices = @transform_8, window_bounds = array<i64: 1, 128>}, {transform_indices = @transform_9, window_bounds = array<i64: 8, 128>}]} {
    %c0 = arith.constant 0 : index
    %c0_0 = arith.constant 0 : index
    %0 = vector.load %arg1[%c0, %c0_0] : memref<8x128xf32, #tpu.memory_space<vmem>>, vector<8x128xf32>
    %c0_1 = arith.constant 0 : index
    %c0_2 = arith.constant 0 : index
    %1 = vector.load %arg4[%c0_1, %c0_2] : memref<128x128xf32, #tpu.memory_space<vmem>>, vector<128x128xf32>
    %cst = arith.constant dense<0.000000e+00> : vector<8x128xf32>
    %2 = tpu.matmul %0, %1, %cst {dimension_numbers = #tpu.dot_dimension_numbers<[1], [0], [0], [1], [0, 0, 1, 1], [], []>} : vector<8x128xf32>, vector<128x128xf32>, vector<8x128xf32> -> vector<8x128xf32>
    %c0_3 = arith.constant 0 : index
    %c0_4 = arith.constant 0 : index
    %3 = vector.load %arg5[%c0_3, %c0_4] : memref<1x128xf32, #tpu.memory_space<vmem>>, vector<1x128xf32>
    %4 = vector.broadcast %3 : vector<1x128xf32> to vector<8x128xf32>
    %5 = arith.addf %2, %4 : vector<8x128xf32>
    %c0_5 = arith.constant 0 : index
    %c0_6 = arith.constant 0 : index
    %6 = vector.load %arg2[%c0_5, %c0_6] : memref<8x128xf32, #tpu.memory_space<vmem>>, vector<8x128xf32>
    %c0_7 = arith.constant 0 : index
    %c0_8 = arith.constant 0 : index
    %7 = vector.load %arg6[%c0_7, %c0_8] : memref<128x128xf32, #tpu.memory_space<vmem>>, vector<128x128xf32>
    %cst_9 = arith.constant dense<0.000000e+00> : vector<8x128xf32>
    %8 = tpu.matmul %6, %7, %cst_9 {dimension_numbers = #tpu.dot_dimension_numbers<[1], [0], [0], [1], [0, 0, 1, 1], [], []>} : vector<8x128xf32>, vector<128x128xf32>, vector<8x128xf32> -> vector<8x128xf32>
    %c0_10 = arith.constant 0 : index
    %c0_11 = arith.constant 0 : index
    %9 = vector.load %arg7[%c0_10, %c0_11] : memref<128x128xf32, #tpu.memory_space<vmem>>, vector<128x128xf32>
    %cst_12 = arith.constant dense<0.000000e+00> : vector<8x128xf32>
    %10 = tpu.matmul %5, %9, %cst_12 {dimension_numbers = #tpu.dot_dimension_numbers<[1], [0], [0], [1], [0, 0, 1, 1], [], []>} : vector<8x128xf32>, vector<128x128xf32>, vector<8x128xf32> -> vector<8x128xf32>
    %11 = arith.addf %8, %10 : vector<8x128xf32>
    %c0_13 = arith.constant 0 : index
    %c0_14 = arith.constant 0 : index
    %12 = vector.load %arg8[%c0_13, %c0_14] : memref<1x128xf32, #tpu.memory_space<vmem>>, vector<1x128xf32>
    %13 = vector.broadcast %12 : vector<1x128xf32> to vector<8x128xf32>
    %14 = arith.addf %11, %13 : vector<8x128xf32>
    %c0_15 = arith.constant 0 : index
    %c0_16 = arith.constant 0 : index
    %15 = vector.load %arg9[%c0_15, %c0_16] : memref<1x128xf32, #tpu.memory_space<vmem>>, vector<1x128xf32>
    %16 = vector.broadcast %15 : vector<1x128xf32> to vector<8x128xf32>
    %17 = arith.mulf %14, %16 : vector<8x128xf32>
    %cst_17 = arith.constant 0.000000e+00 : f32
    %18 = vector.broadcast %cst_17 : f32 to vector<8x8xf32>
    %c0_18 = arith.constant 0 : index
    %c0_19 = arith.constant 0 : index
    %c0_20 = arith.constant 0 : index
    %19 = vector.load %arg3[%c0_18, %c0_19, %c0_20] : memref<8x8x128xbf16, #tpu.memory_space<vmem>>, vector<8x8x128xbf16>
    %20 = arith.extf %19 : vector<8x8x128xbf16> to vector<8x8x128xf32>
    %21 = vector.shape_cast %17 : vector<8x128xf32> to vector<8x1x128xf32>
    %22 = vector.broadcast %21 : vector<8x1x128xf32> to vector<8x8x128xf32>
    %23 = arith.mulf %20, %22 : vector<8x8x128xf32>
    %cst_21 = arith.constant dense<0.000000e+00> : vector<8x8xf32>
    %24 = vector.multi_reduction <add>, %23, %cst_21 [2] : vector<8x8x128xf32> to vector<8x8xf32>
    %25 = arith.addf %18, %24 : vector<8x8xf32>
    %cst_22 = arith.constant dense<0xFF800000> : vector<8xf32>
    %26 = vector.multi_reduction <maximumf>, %25, %cst_22 [1] : vector<8x8xf32> to vector<8xf32>
    %27 = vector.shape_cast %26 : vector<8xf32> to vector<8x1xf32>
    %28 = vector.broadcast %27 : vector<8x1xf32> to vector<8x8xf32>
    %29 = arith.subf %25, %28 : vector<8x8xf32>
    %30 = math.exp %29 : vector<8x8xf32>
    %cst_23 = arith.constant dense<0.000000e+00> : vector<8xf32>
    %31 = vector.multi_reduction <add>, %30, %cst_23 [1] : vector<8x8xf32> to vector<8xf32>
    %32 = vector.shape_cast %31 : vector<8xf32> to vector<8x1xf32>
    %33 = vector.broadcast %32 : vector<8x1xf32> to vector<8x8xf32>
    %34 = arith.divf %30, %33 : vector<8x8xf32>
    %35 = vector.shape_cast %34 : vector<8x8xf32> to vector<8x8x1xf32>
    %c0_24 = arith.constant 0 : index
    %c0_25 = arith.constant 0 : index
    %c0_26 = arith.constant 0 : index
    %36 = vector.load %arg3[%c0_24, %c0_25, %c0_26] : memref<8x8x128xbf16, #tpu.memory_space<vmem>>, vector<8x8x128xbf16>
    %37 = arith.extf %36 : vector<8x8x128xbf16> to vector<8x8x128xf32>
    %38 = vector.broadcast %35 : vector<8x8x1xf32> to vector<8x8x128xf32>
    %39 = arith.mulf %38, %37 : vector<8x8x128xf32>
    %cst_27 = arith.constant dense<0.000000e+00> : vector<8x128xf32>
    %40 = vector.multi_reduction <add>, %39, %cst_27 [1] : vector<8x8x128xf32> to vector<8x128xf32>
    %c0_28 = arith.constant 0 : index
    %c0_29 = arith.constant 0 : index
    %41 = vector.load %arg10[%c0_28, %c0_29] : memref<8x128xf32, #tpu.memory_space<vmem>>, vector<8x128xf32>
    tpu.vector_store %arg10[%c0_28, %c0_29], %40 {strides = array<i32>} : memref<8x128xf32, #tpu.memory_space<vmem>>, vector<8x128xf32>,
    return
  }
  func.func @transform_0(%arg0: i32) -> (i32, i32) {
    %c0_i32 = arith.constant 0 : i32
    %c0_i32_0 = arith.constant 0 : i32
    return %arg0, %c0_i32 : i32, i32
  }
  func.func @transform_1(%arg0: i32) -> (i32, i32) {
    %c0_i32 = arith.constant 0 : i32
    %c0_i32_0 = arith.constant 0 : i32
    return %arg0, %c0_i32 : i32, i32
  }
  func.func @transform_2(%arg0: i32) -> (i32, i32, i32) {
    %c0_i32 = arith.constant 0 : i32
    %c0_i32_0 = arith.constant 0 : i32
    %c0_i32_1 = arith.constant 0 : i32
    return %arg0, %c0_i32, %c0_i32_0 : i32, i32, i32
  }
  func.func @transform_3(%arg0: i32) -> (i32, i32) {
    %c0_i32 = arith.constant 0 : i32
    %c0_i32_0 = arith.constant 0 : i32
    %c0_i32_1 = arith.constant 0 : i32
    return %c0_i32, %c0_i32_0 : i32, i32
  }
  func.func @transform_4(%arg0: i32) -> (i32, i32) {
    %c0_i32 = arith.constant 0 : i32
    %c0_i32_0 = arith.constant 0 : i32
    %c0_i32_1 = arith.constant 0 : i32
    return %c0_i32, %c0_i32_0 : i32, i32
  }
  func.func @transform_5(%arg0: i32) -> (i32, i32) {
    %c0_i32 = arith.constant 0 : i32
    %c0_i32_0 = arith.constant 0 : i32
    %c0_i32_1 = arith.constant 0 : i32
    return %c0_i32, %c0_i32_0 : i32, i32
  }
  func.func @transform_6(%arg0: i32) -> (i32, i32) {
    %c0_i32 = arith.constant 0 : i32
    %c0_i32_0 = arith.constant 0 : i32
    %c0_i32_1 = arith.constant 0 : i32
    return %c0_i32, %c0_i32_0 : i32, i32
  }
  func.func @transform_7(%arg0: i32) -> (i32, i32) {
    %c0_i32 = arith.constant 0 : i32
    %c0_i32_0 = arith.constant 0 : i32
    %c0_i32_1 = arith.constant 0 : i32
    return %c0_i32, %c0_i32_0 : i32, i32
  }
  func.func @transform_8(%arg0: i32) -> (i32, i32) {
    %c0_i32 = arith.constant 0 : i32
    %c0_i32_0 = arith.constant 0 : i32
    %c0_i32_1 = arith.constant 0 : i32
    return %c0_i32, %c0_i32_0 : i32, i32
  }
  func.func @transform_9(%arg0: i32) -> (i32, i32) {
    %c0_i32 = arith.constant 0 : i32
    %c0_i32_0 = arith.constant 0 : i32
    return %arg0, %c0_i32 : i32, i32
  }
}

</mosaic_0001>

<llo_original>
// kernel: control_unit_forward.1
$region0: #{control_unit_forward.1}
  #allocation0 [shape = 'u32[]', space=smem, size = 0x4, offset = 0x4, fixed_abs, tag = 'smem constant byte address 0x4 - core index']
  #allocation1 [shape = 'u32[72,128]{1,0:T(1,128)}', space=vmem, size = 0x9000, scoped, tag = 'internal scratch']
  %s0 = inlined_call_operand.vmem [shape: f32[8,128], index: 0, kind: input, shape index: {}]
  %s1 = inlined_call_operand.vmem [shape: f32[8,128], index: 1, kind: input, shape index: {}]
  %s2 = inlined_call_operand.vmem [shape: bf16[8,8,128], index: 2, kind: input, shape index: {}]
  %s3 = inlined_call_operand.vmem [shape: f32[128,128], index: 3, kind: input, shape index: {}]
  %s4 = inlined_call_operand.vmem [shape: f32[1,128], index: 4, kind: input, shape index: {}]
  %s5 = inlined_call_operand.vmem [shape: f32[128,128], index: 5, kind: input, shape index: {}]
  %s6 = inlined_call_operand.vmem [shape: f32[128,128], index: 6, kind: input, shape index: {}]
  %s7 = inlined_call_operand.vmem [shape: f32[1,128], index: 7, kind: input, shape index: {}]
  %s8 = inlined_call_operand.vmem [shape: f32[1,128], index: 8, kind: input, shape index: {}]
  %s9 = inlined_call_operand.vmem [shape: f32[8,128], index: 9, kind: output, shape index: {}]
  %s10 = sld [smem:[#allocation0]]
  $region46: #{control_unit_forward.1} parent=0
    _
  %s12 = ssub.s32 1, %s10
  %s13 = scalar_select 0, %s12, %s10
  // Predicated region
  $region2: #{control_unit_forward.1} parent=0 // pred_check
    _
  $region3: #{control_unit_forward.1} parent=0 // pred_check_branch
    %15 = sbr.rel (0) target = $region5
  $region4: #{control_unit_forward.1} parent=0 // pred_region
    _
  $region5: #{control_unit_forward.1} parent=0 // pred_fallthru
    _
  // Predicated region
  $region6: #{control_unit_forward.1} parent=0 // pred_check
    _
  $region7: #{control_unit_forward.1} parent=0 // pred_check_branch
    %17 = sbr.rel (0) target = $region9
  $region8: #{control_unit_forward.1} parent=0 // pred_region
    _
  $region9: #{control_unit_forward.1} parent=0 // pred_fallthru
    _
  // Predicated region
  $region10: #{control_unit_forward.1} parent=0 // pred_check
    _
  $region11: #{control_unit_forward.1} parent=0 // pred_check_branch
    %19 = sbr.rel (0) target = $region13
  $region12: #{control_unit_forward.1} parent=0 // pred_region
    _
  $region13: #{control_unit_forward.1} parent=0 // pred_fallthru
    _
  // Predicated region
  $region14: #{control_unit_forward.1} parent=0 // pred_check
    _
  $region15: #{control_unit_forward.1} parent=0 // pred_check_branch
    %21 = sbr.rel (0) target = $region17
  $region16: #{control_unit_forward.1} parent=0 // pred_region
    _
  $region17: #{control_unit_forward.1} parent=0 // pred_fallthru
    _
  // Predicated region
  $region18: #{control_unit_forward.1} parent=0 // pred_check
    _
  $region19: #{control_unit_forward.1} parent=0 // pred_check_branch
    %23 = sbr.rel (0) target = $region21
  $region20: #{control_unit_forward.1} parent=0 // pred_region
    _
  $region21: #{control_unit_forward.1} parent=0 // pred_fallthru
    _
  // Predicated region
  $region22: #{control_unit_forward.1} parent=0 // pred_check
    _
  $region23: #{control_unit_forward.1} parent=0 // pred_check_branch
    %25 = sbr.rel (0) target = $region25
  $region24: #{control_unit_forward.1} parent=0 // pred_region
    _
  $region25: #{control_unit_forward.1} parent=0 // pred_fallthru
    _
  // Predicated region
  $region26: #{control_unit_forward.1} parent=0 // pred_check
    _
  $region27: #{control_unit_forward.1} parent=0 // pred_check_branch
    %27 = sbr.rel (0) target = $region29
  $region28: #{control_unit_forward.1} parent=0 // pred_region
    _
  $region29: #{control_unit_forward.1} parent=0 // pred_fallthru
    _
  // Predicated region
  $region30: #{control_unit_forward.1} parent=0 // pred_check
    _
  $region31: #{control_unit_forward.1} parent=0 // pred_check_branch
    %29 = sbr.rel (0) target = $region33
  $region32: #{control_unit_forward.1} parent=0 // pred_region
    _
  $region33: #{control_unit_forward.1} parent=0 // pred_fallthru
    _
  // Predicated region
  $region34: #{control_unit_forward.1} parent=0 // pred_check
    _
  $region35: #{control_unit_forward.1} parent=0 // pred_check_branch
    %31 = sbr.rel (0) target = $region37
  $region36: #{control_unit_forward.1} parent=0 // pred_region
    _
  $region37: #{control_unit_forward.1} parent=0 // pred_fallthru
    _
  %v32 = vld [vmem:[%s0] sm:$0xff]
  %v33 = vld [vmem:[%s3] sm:$0xff]
  %v34 = vld [vmem:[%s3 + $0x8] sm:$0xff]
  %v35 = vld [vmem:[%s3 + $0x10] sm:$0xff]
  %v36 = vld [vmem:[%s3 + $0x18] sm:$0xff]
  %v37 = vld [vmem:[%s3 + $0x20] sm:$0xff]
  %v38 = vld [vmem:[%s3 + $0x28] sm:$0xff]
  %v39 = vld [vmem:[%s3 + $0x30] sm:$0xff]
  %v40 = vld [vmem:[%s3 + $0x38] sm:$0xff]
  %v41 = vld [vmem:[%s3 + $0x40] sm:$0xff]
  %v42 = vld [vmem:[%s3 + $0x48] sm:$0xff]
  %v43 = vld [vmem:[%s3 + $0x50] sm:$0xff]
  %v44 = vld [vmem:[%s3 + $0x58] sm:$0xff]
  %v45 = vld [vmem:[%s3 + $0x60] sm:$0xff]
  %v46 = vld [vmem:[%s3 + $0x68] sm:$0xff]
  %v47 = vld [vmem:[%s3 + $0x70] sm:$0xff]
  %v48 = vld [vmem:[%s3 + $0x78] sm:$0xff]
  %v49 = vld [vmem:[%s4] sm:$0x1]
  %v51 = vperm.slane %v49, 0
  %53 = vmatpush.msra.mxu0 %v48
  %54 = vmatpush.msra.mxu0 %v47
  %55 = vmatpush.msra.mxu0 %v46
  %56 = vmatpush.msra.mxu0 %v45
  %57 = vmatpush.msra.mxu0 %v44
  %58 = vmatpush.msra.mxu0 %v43
  %59 = vmatpush.msra.mxu0 %v42
  %60 = vmatpush.msra.mxu0 %v41
  %61 = vmatpush.msra.mxu0 %v40
  %62 = vmatpush.msra.mxu0 %v39
  %63 = vmatpush.msra.mxu0 %v38
  %64 = vmatpush.msra.mxu0 %v37
  %65 = vmatpush.msra.mxu0 %v36
  %66 = vmatpush.msra.mxu0 %v35
  %67 = vmatpush.msra.mxu0 %v34
  %68 = vmatpush.msra.mxu0 %v33
  %69 = vmatmul.f32.gmra.mxu0 %v32
  %v70 = vpop.f32.mrf.mxu0
  %v71 = vadd.f32 %v51, %v70
  %72 = vdwg.mxu0
  %v73 = vld [vmem:[%s1] sm:$0xff]
  %v74 = vld [vmem:[%s5] sm:$0xff]
  %v75 = vld [vmem:[%s5 + $0x8] sm:$0xff]
  %v76 = vld [vmem:[%s5 + $0x10] sm:$0xff]
  %v77 = vld [vmem:[%s5 + $0x18] sm:$0xff]
  %v78 = vld [vmem:[%s5 + $0x20] sm:$0xff]
  %v79 = vld [vmem:[%s5 + $0x28] sm:$0xff]
  %v80 = vld [vmem:[%s5 + $0x30] sm:$0xff]
  %v81 = vld [vmem:[%s5 + $0x38] sm:$0xff]
  %v82 = vld [vmem:[%s5 + $0x40] sm:$0xff]
  %v83 = vld [vmem:[%s5 + $0x48] sm:$0xff]
  %v84 = vld [vmem:[%s5 + $0x50] sm:$0xff]
  %v85 = vld [vmem:[%s5 + $0x58] sm:$0xff]
  %v86 = vld [vmem:[%s5 + $0x60] sm:$0xff]
  %v87 = vld [vmem:[%s5 + $0x68] sm:$0xff]
  %v88 = vld [vmem:[%s5 + $0x70] sm:$0xff]
  %v89 = vld [vmem:[%s5 + $0x78] sm:$0xff]
  %v90 = vld [vmem:[%s6] sm:$0xff]
  %v91 = vld [vmem:[%s6 + $0x8] sm:$0xff]
  %v92 = vld [vmem:[%s6 + $0x10] sm:$0xff]
  %v93 = vld [vmem:[%s6 + $0x18] sm:$0xff]
  %v94 = vld [vmem:[%s6 + $0x20] sm:$0xff]
  %v95 = vld [vmem:[%s6 + $0x28] sm:$0xff]
  %v96 = vld [vmem:[%s6 + $0x30] sm:$0xff]
  %v97 = vld [vmem:[%s6 + $0x38] sm:$0xff]
  %v98 = vld [vmem:[%s6 + $0x40] sm:$0xff]
  %v99 = vld [vmem:[%s6 + $0x48] sm:$0xff]
  %v100 = vld [vmem:[%s6 + $0x50] sm:$0xff]
  %v101 = vld [vmem:[%s6 + $0x58] sm:$0xff]
  %v102 = vld [vmem:[%s6 + $0x60] sm:$0xff]
  %v103 = vld [vmem:[%s6 + $0x68] sm:$0xff]
  %v104 = vld [vmem:[%s6 + $0x70] sm:$0xff]
  %v105 = vld [vmem:[%s6 + $0x78] sm:$0xff]
  %106 = vmatpush.msra.mxu0 %v105
  %107 = vmatpush.msra.mxu0 %v104
  %108 = vmatpush.msra.mxu0 %v103
  %109 = vmatpush.msra.mxu0 %v102
  %110 = vmatpush.msra.mxu0 %v101
  %111 = vmatpush.msra.mxu0 %v100
  %112 = vmatpush.msra.mxu0 %v99
  %113 = vmatpush.msra.mxu0 %v98
  %114 = vmatpush.msra.mxu0 %v97
  %115 = vmatpush.msra.mxu0 %v96
  %116 = vmatpush.msra.mxu0 %v95
  %117 = vmatpush.msra.mxu0 %v94
  %118 = vmatpush.msra.mxu0 %v93
  %119 = vmatpush.msra.mxu0 %v92
  %120 = vmatpush.msra.mxu0 %v91
  %121 = vmatpush.msra.mxu0 %v90
  %122 = vmatmul.f32.gmra.mxu0 %v71
  %v123 = vpop.f32.mrf.mxu0
  %v124 = vadd.f32 0.0, %v123
  %125 = vdwg.mxu0
  %126 = vmatpush.msra.mxu0 %v89
  %127 = vmatpush.msra.mxu0 %v88
  %128 = vmatpush.msra.mxu0 %v87
  %129 = vmatpush.msra.mxu0 %v86
  %130 = vmatpush.msra.mxu0 %v85
  %131 = vmatpush.msra.mxu0 %v84
  %132 = vmatpush.msra.mxu0 %v83
  %133 = vmatpush.msra.mxu0 %v82
  %134 = vmatpush.msra.mxu0 %v81
  %135 = vmatpush.msra.mxu0 %v80
  %136 = vmatpush.msra.mxu0 %v79
  %137 = vmatpush.msra.mxu0 %v78
  %138 = vmatpush.msra.mxu0 %v77
  %139 = vmatpush.msra.mxu0 %v76
  %140 = vmatpush.msra.mxu0 %v75
  %141 = vmatpush.msra.mxu0 %v74
  %142 = vmatmul.f32.gmra.mxu0 %v73
  %v143 = vpop.f32.mrf.mxu0
  %v144 = vadd.f32 %v124, %v143
  %145 = vdwg.mxu0
  %v146 = vld [vmem:[%s7] sm:$0x1]
  %v148 = vperm.slane %v146, 0
  %v150 = vadd.f32 %v144, %v148
  %v151 = vld [vmem:[%s8] sm:$0x1]
  %v153 = vperm.slane %v151, 0
  %v155 = vmul.f32 %v150, %v153
  %v156 = vld [vmem:[%s2] sm:$0xf]
  %v157 = vld [vmem:[%s2 + $0x4] sm:$0xf]
  %v158 = vld [vmem:[%s2 + $0x8] sm:$0xf]
  %v159 = vld [vmem:[%s2 + $0xc] sm:$0xf]
  %v160 = vld [vmem:[%s2 + $0x10] sm:$0xf]
  %v161 = vld [vmem:[%s2 + $0x14] sm:$0xf]
  %v162 = vld [vmem:[%s2 + $0x18] sm:$0xf]
  %v163 = vld [vmem:[%s2 + $0x1c] sm:$0xf]
  %v164 = vunpack.c.l.bf16 %v156
  %v165 = vunpack.c.l.bf16 %v157
  %v166 = vunpack.c.l.bf16 %v158
  %v167 = vunpack.c.l.bf16 %v159
  %v168 = vunpack.c.l.bf16 %v160
  %v169 = vunpack.c.l.bf16 %v161
  %v170 = vunpack.c.l.bf16 %v162
  %v171 = vunpack.c.l.bf16 %v163
  %v173 = vrot.slane %v155, 1
  %v174 = vrot.slane %v155, 2
  %v175 = vrot.slane %v155, 3
  %v176 = vrot.slane %v155, 4
  %v177 = vrot.slane %v155, 5
  %v178 = vrot.slane %v155, 6
  %v179 = vrot.slane %v155, 7
  %v180 = vperm.slane %v155, 0
  %v181 = vperm.slane %v173, 0
  %v182 = vperm.slane %v174, 0
  %v183 = vperm.slane %v175, 0
  %v184 = vperm.slane %v176, 0
  %v185 = vperm.slane %v177, 0
  %v186 = vperm.slane %v178, 0
  %v187 = vperm.slane %v179, 0
  %v196 = vmul.f32 %v164, %v180
  %v197 = vmul.f32 %v165, %v181
  %v198 = vmul.f32 %v166, %v182
  %v199 = vmul.f32 %v167, %v183
  %v200 = vmul.f32 %v168, %v184
  %v201 = vmul.f32 %v169, %v185
  %v202 = vmul.f32 %v170, %v186
  %v203 = vmul.f32 %v171, %v187
  %204 = vadd.xlane.f32.xlu0 %v196
  %v205 = vpop.xlane.xlu0 %204
  %206 = vadd.xlane.f32.xlu0 %v197
  %v207 = vpop.xlane.xlu0 %206
  %208 = vadd.xlane.f32.xlu0 %v198
  %v209 = vpop.xlane.xlu0 %208
  %210 = vadd.xlane.f32.xlu0 %v199
  %v211 = vpop.xlane.xlu0 %210
  %212 = vadd.xlane.f32.xlu0 %v200
  %v213 = vpop.xlane.xlu0 %212
  %214 = vadd.xlane.f32.xlu0 %v201
  %v215 = vpop.xlane.xlu0 %214
  %216 = vadd.xlane.f32.xlu0 %v202
  %v217 = vpop.xlane.xlu0 %216
  %218 = vadd.xlane.f32.xlu0 %v203
  %v219 = vpop.xlane.xlu0 %218
  %v220 = vadd.f32 %v205, 0.0
  %v221 = vadd.f32 %v207, 0.0
  %v222 = vadd.f32 %v209, 0.0
  %v223 = vadd.f32 %v211, 0.0
  %v224 = vadd.f32 %v213, 0.0
  %v225 = vadd.f32 %v215, 0.0
  %v226 = vadd.f32 %v217, 0.0
  %v227 = vadd.f32 %v219, 0.0
  %v236 = vlaneseq
  %v237 = vand.u32 %v236, 127
  %v238 = vperm.slane %v220, %v237
  %v239 = vperm.slane %v221, %v237
  %v240 = vperm.slane %v222, %v237
  %v241 = vperm.slane %v223, %v237
  %v242 = vperm.slane %v224, %v237
  %v243 = vperm.slane %v225, %v237
  %v244 = vperm.slane %v226, %v237
  %v245 = vperm.slane %v227, %v237
  %vm246 = vcmask 1041409
  %v247 = vsel %vm246, %v239, %v238
  %vm248 = vcmask 1042434
  %v249 = vsel %vm248, %v240, %v247
  %vm250 = vcmask 1043459
  %v251 = vsel %vm250, %v241, %v249
  %vm252 = vcmask 1044484
  %v253 = vsel %vm252, %v242, %v251
  %vm254 = vcmask 1045509
  %v255 = vsel %vm254, %v243, %v253
  %vm256 = vcmask 1046534
  %v257 = vsel %vm256, %v244, %v255
  %vm258 = vcmask 1047559
  %v259 = vsel %vm258, %v245, %v257
  %vm261 = vcmask 64512
  %v262 = vsel %vm261, %v259, -inf
  %263 = vmax.xlane.f32.xlu0 %v262
  %v264 = vpop.xlane.xlu0 %263
  %v266 = vperm.slane %v264, 0
  %v267 = vperm.slane %v264, 1
  %v268 = vperm.slane %v264, 2
  %v269 = vperm.slane %v264, 3
  %v270 = vperm.slane %v264, 4
  %v271 = vperm.slane %v264, 5
  %v272 = vperm.slane %v264, 6
  %v273 = vperm.slane %v264, 7
  %v282 = vsub.f32 %v220, %v266
  %v283 = vsub.f32 %v221, %v267
  %v284 = vsub.f32 %v222, %v268
  %v285 = vsub.f32 %v223, %v269
  %v286 = vsub.f32 %v224, %v270
  %v287 = vsub.f32 %v225, %v271
  %v288 = vsub.f32 %v226, %v272
  %v289 = vsub.f32 %v227, %v273
  %v290 = vmul.f32 %v282, 1.442695
  %v291 = vpow.pop %v290
  %v292 = vmul.f32 %v283, 1.442695
  %v293 = vpow.pop %v292
  %v294 = vmul.f32 %v284, 1.442695
  %v295 = vpow.pop %v294
  %v296 = vmul.f32 %v285, 1.442695
  %v297 = vpow.pop %v296
  %v298 = vmul.f32 %v286, 1.442695
  %v299 = vpow.pop %v298
  %v300 = vmul.f32 %v287, 1.442695
  %v301 = vpow.pop %v300
  %v302 = vmul.f32 %v288, 1.442695
  %v303 = vpow.pop %v302
  %v304 = vmul.f32 %v289, 1.442695
  %v305 = vpow.pop %v304
  %314 = vset.pattern.permute.xlu0 0
  %315 = vperm.xlu0 %314, %v291
  %v316 = vpop.permute.xlu0 %315
  %317 = vset.pattern.permute.xlu0 0
  %318 = vperm.xlu0 %317, %v293
  %v319 = vpop.permute.xlu0 %318
  %320 = vset.pattern.permute.xlu0 0
  %321 = vperm.xlu0 %320, %v295
  %v322 = vpop.permute.xlu0 %321
  %323 = vset.pattern.permute.xlu0 0
  %324 = vperm.xlu0 %323, %v297
  %v325 = vpop.permute.xlu0 %324
  %326 = vset.pattern.permute.xlu0 0
  %327 = vperm.xlu0 %326, %v299
  %v328 = vpop.permute.xlu0 %327
  %329 = vset.pattern.permute.xlu0 0
  %330 = vperm.xlu0 %329, %v301
  %v331 = vpop.permute.xlu0 %330
  %332 = vset.pattern.permute.xlu0 0
  %333 = vperm.xlu0 %332, %v303
  %v334 = vpop.permute.xlu0 %333
  %335 = vset.pattern.permute.xlu0 0
  %336 = vperm.xlu0 %335, %v305
  %v337 = vpop.permute.xlu0 %336
  %v338 = vperm.slane %v316, %v237
  %v339 = vperm.slane %v319, %v237
  %v340 = vperm.slane %v322, %v237
  %v341 = vperm.slane %v325, %v237
  %v342 = vperm.slane %v328, %v237
  %v343 = vperm.slane %v331, %v237
  %v344 = vperm.slane %v334, %v237
  %v345 = vperm.slane %v337, %v237
  %v346 = vsel %vm246, %v339, %v338
  %v347 = vsel %vm248, %v340, %v346
  %v348 = vsel %vm250, %v341, %v347
  %v349 = vsel %vm252, %v342, %v348
  %v350 = vsel %vm254, %v343, %v349
  %v351 = vsel %vm256, %v344, %v350
  %v352 = vsel %vm258, %v345, %v351
  %v354 = vsel %vm261, %v352, 0.0
  %355 = vadd.xlane.f32.xlu0 %v354
  %v356 = vpop.xlane.xlu0 %355
  %v358 = vperm.slane %v356, 0
  %v359 = vperm.slane %v356, 1
  %v360 = vperm.slane %v356, 2
  %v361 = vperm.slane %v356, 3
  %v362 = vperm.slane %v356, 4
  %v363 = vperm.slane %v356, 5
  %v364 = vperm.slane %v356, 6
  %v365 = vperm.slane %v356, 7
  %v374 = vrcp.pop %v358
  %v375 = vmul.f32 %v358, %v374
  %v376 = vsub.f32 1.0, %v375
  %v377 = vmul.f32 %v374, %v376
  %v378 = vadd.f32 %v374, %v377
  %vm379 = vweird.f32 %v358
  %vm380 = vweird.f32 %v374
  %vm381 = vmor %vm379, %vm380
  %v382 = vsel %vm381, %v374, %v378
  %v383 = vand.u32 2147483647, %v358
  %vm384 = vcmp.eq.f32.partialorder %v383, 8.507059e+37
  %v385 = vand.u32 %v358, 2147483648
  %v386 = vor.u32 1.1754944e-38, %v385
  %v387 = vsel %vm384, %v386, %v382
  %v388 = vmul.f32 %v291, %v387
  %v389 = vrcp.pop %v359
  %v390 = vmul.f32 %v359, %v389
  %v391 = vsub.f32 1.0, %v390
  %v392 = vmul.f32 %v389, %v391
  %v393 = vadd.f32 %v389, %v392
  %vm394 = vweird.f32 %v359
  %vm395 = vweird.f32 %v389
  %vm396 = vmor %vm394, %vm395
  %v397 = vsel %vm396, %v389, %v393
  %v398 = vand.u32 2147483647, %v359
  %vm399 = vcmp.eq.f32.partialorder %v398, 8.507059e+37
  %v400 = vand.u32 %v359, 2147483648
  %v401 = vor.u32 1.1754944e-38, %v400
  %v402 = vsel %vm399, %v401, %v397
  %v403 = vmul.f32 %v293, %v402
  %v404 = vrcp.pop %v360
  %v405 = vmul.f32 %v360, %v404
  %v406 = vsub.f32 1.0, %v405
  %v407 = vmul.f32 %v404, %v406
  %v408 = vadd.f32 %v404, %v407
  %vm409 = vweird.f32 %v360
  %vm410 = vweird.f32 %v404
  %vm411 = vmor %vm409, %vm410
  %v412 = vsel %vm411, %v404, %v408
  %v413 = vand.u32 2147483647, %v360
  %vm414 = vcmp.eq.f32.partialorder %v413, 8.507059e+37
  %v415 = vand.u32 %v360, 2147483648
  %v416 = vor.u32 1.1754944e-38, %v415
  %v417 = vsel %vm414, %v416, %v412
  %v418 = vmul.f32 %v295, %v417
  %v419 = vrcp.pop %v361
  %v420 = vmul.f32 %v361, %v419
  %v421 = vsub.f32 1.0, %v420
  %v422 = vmul.f32 %v419, %v421
  %v423 = vadd.f32 %v419, %v422
  %vm424 = vweird.f32 %v361
  %vm425 = vweird.f32 %v419
  %vm426 = vmor %vm424, %vm425
  %v427 = vsel %vm426, %v419, %v423
  %v428 = vand.u32 2147483647, %v361
  %vm429 = vcmp.eq.f32.partialorder %v428, 8.507059e+37
  %v430 = vand.u32 %v361, 2147483648
  %v431 = vor.u32 1.1754944e-38, %v430
  %v432 = vsel %vm429, %v431, %v427
  %v433 = vmul.f32 %v297, %v432
  %v434 = vrcp.pop %v362
  %v435 = vmul.f32 %v362, %v434
  %v436 = vsub.f32 1.0, %v435
  %v437 = vmul.f32 %v434, %v436
  %v438 = vadd.f32 %v434, %v437
  %vm439 = vweird.f32 %v362
  %vm440 = vweird.f32 %v434
  %vm441 = vmor %vm439, %vm440
  %v442 = vsel %vm441, %v434, %v438
  %v443 = vand.u32 2147483647, %v362
  %vm444 = vcmp.eq.f32.partialorder %v443, 8.507059e+37
  %v445 = vand.u32 %v362, 2147483648
  %v446 = vor.u32 1.1754944e-38, %v445
  %v447 = vsel %vm444, %v446, %v442
  %v448 = vmul.f32 %v299, %v447
  %v449 = vrcp.pop %v363
  %v450 = vmul.f32 %v363, %v449
  %v451 = vsub.f32 1.0, %v450
  %v452 = vmul.f32 %v449, %v451
  %v453 = vadd.f32 %v449, %v452
  %vm454 = vweird.f32 %v363
  %vm455 = vweird.f32 %v449
  %vm456 = vmor %vm454, %vm455
  %v457 = vsel %vm456, %v449, %v453
  %v458 = vand.u32 2147483647, %v363
  %vm459 = vcmp.eq.f32.partialorder %v458, 8.507059e+37
  %v460 = vand.u32 %v363, 2147483648
  %v461 = vor.u32 1.1754944e-38, %v460
  %v462 = vsel %vm459, %v461, %v457
  %v463 = vmul.f32 %v301, %v462
  %v464 = vrcp.pop %v364
  %v465 = vmul.f32 %v364, %v464
  %v466 = vsub.f32 1.0, %v465
  %v467 = vmul.f32 %v464, %v466
  %v468 = vadd.f32 %v464, %v467
  %vm469 = vweird.f32 %v364
  %vm470 = vweird.f32 %v464
  %vm471 = vmor %vm469, %vm470
  %v472 = vsel %vm471, %v464, %v468
  %v473 = vand.u32 2147483647, %v364
  %vm474 = vcmp.eq.f32.partialorder %v473, 8.507059e+37
  %v475 = vand.u32 %v364, 2147483648
  %v476 = vor.u32 1.1754944e-38, %v475
  %v477 = vsel %vm474, %v476, %v472
  %v478 = vmul.f32 %v303, %v477
  %v479 = vrcp.pop %v365
  %v480 = vmul.f32 %v365, %v479
  %v481 = vsub.f32 1.0, %v480
  %v482 = vmul.f32 %v479, %v481
  %v483 = vadd.f32 %v479, %v482
  %vm484 = vweird.f32 %v365
  %vm485 = vweird.f32 %v479
  %vm486 = vmor %vm484, %vm485
  %v487 = vsel %vm486, %v479, %v483
  %v488 = vand.u32 2147483647, %v365
  %vm489 = vcmp.eq.f32.partialorder %v488, 8.507059e+37
  %v490 = vand.u32 %v365, 2147483648
  %v491 = vor.u32 1.1754944e-38, %v490
  %v492 = vsel %vm489, %v491, %v487
  %v493 = vmul.f32 %v305, %v492
  %495 = vset.pattern.permute.xlu0 0
  %496 = vperm.xlu0 %495, %v388
  %v497 = vpop.permute.xlu0 %496
  %500 = vset.pattern.permute.xlu0 0
  %501 = vperm.xlu0 %500, %v403
  %v502 = vpop.permute.xlu0 %501
  %505 = vset.pattern.permute.xlu0 0
  %506 = vperm.xlu0 %505, %v418
  %v507 = vpop.permute.xlu0 %506
  %510 = vset.pattern.permute.xlu0 0
  %511 = vperm.xlu0 %510, %v433
  %v512 = vpop.permute.xlu0 %511
  %515 = vset.pattern.permute.xlu0 0
  %516 = vperm.xlu0 %515, %v448
  %v517 = vpop.permute.xlu0 %516
  %520 = vset.pattern.permute.xlu0 0
  %521 = vperm.xlu0 %520, %v463
  %v522 = vpop.permute.xlu0 %521
  %525 = vset.pattern.permute.xlu0 0
  %526 = vperm.xlu0 %525, %v478
  %v527 = vpop.permute.xlu0 %526
  %530 = vset.pattern.permute.xlu0 0
  %531 = vperm.xlu0 %530, %v493
  %v532 = vpop.permute.xlu0 %531
  %v534 = vmul.f32 %v497, %v164
  %v535 = vmul.f32 %v502, %v165
  %v536 = vmul.f32 %v507, %v166
  %v537 = vmul.f32 %v512, %v167
  %v538 = vmul.f32 %v517, %v168
  %v539 = vmul.f32 %v522, %v169
  %v540 = vmul.f32 %v527, %v170
  %v541 = vmul.f32 %v532, %v171
  %v542 = vrot.slane %v534, 4
  %v543 = vadd.f32 %v534, %v542
  %v544 = vrot.slane %v543, 2
  %v545 = vadd.f32 %v543, %v544
  %v546 = vrot.slane %v545, 1
  %v547 = vadd.f32 %v545, %v546
  %v548 = vrot.slane %v535, 4
  %v549 = vadd.f32 %v535, %v548
  %v550 = vrot.slane %v549, 2
  %v551 = vadd.f32 %v549, %v550
  %v552 = vrot.slane %v551, 1
  %v553 = vadd.f32 %v551, %v552
  %v554 = vrot.slane %v536, 4
  %v555 = vadd.f32 %v536, %v554
  %v556 = vrot.slane %v555, 2
  %v557 = vadd.f32 %v555, %v556
  %v558 = vrot.slane %v557, 1
  %v559 = vadd.f32 %v557, %v558
  %v560 = vrot.slane %v537, 4
  %v561 = vadd.f32 %v537, %v560
  %v562 = vrot.slane %v561, 2
  %v563 = vadd.f32 %v561, %v562
  %v564 = vrot.slane %v563, 1
  %v565 = vadd.f32 %v563, %v564
  %v566 = vrot.slane %v538, 4
  %v567 = vadd.f32 %v538, %v566
  %v568 = vrot.slane %v567, 2
  %v569 = vadd.f32 %v567, %v568
  %v570 = vrot.slane %v569, 1
  %v571 = vadd.f32 %v569, %v570
  %v572 = vrot.slane %v539, 4
  %v573 = vadd.f32 %v539, %v572
  %v574 = vrot.slane %v573, 2
  %v575 = vadd.f32 %v573, %v574
  %v576 = vrot.slane %v575, 1
  %v577 = vadd.f32 %v575, %v576
  %v578 = vrot.slane %v540, 4
  %v579 = vadd.f32 %v540, %v578
  %v580 = vrot.slane %v579, 2
  %v581 = vadd.f32 %v579, %v580
  %v582 = vrot.slane %v581, 1
  %v583 = vadd.f32 %v581, %v582
  %v584 = vrot.slane %v541, 4
  %v585 = vadd.f32 %v541, %v584
  %v586 = vrot.slane %v585, 2
  %v587 = vadd.f32 %v585, %v586
  %v588 = vrot.slane %v587, 1
  %v589 = vadd.f32 %v587, %v588
  %v598 = vsel %vm246, %v553, %v547
  %v599 = vsel %vm248, %v559, %v598
  %v600 = vsel %vm250, %v565, %v599
  %v601 = vsel %vm252, %v571, %v600
  %v602 = vsel %vm254, %v577, %v601
  %v603 = vsel %vm256, %v583, %v602
  %v604 = vsel %vm258, %v589, %v603
  %606 = vst [vmem:[%s9] sm:$0xff] %v604
  // Predicated region
  $region38: #{control_unit_forward.1} parent=0 // pred_check
    _
  $region39: #{control_unit_forward.1} parent=0 // pred_check_branch
    %608 = sbr.rel (0) target = $region41
  $region40: #{control_unit_forward.1} parent=0 // pred_region
    _
  $region41: #{control_unit_forward.1} parent=0 // pred_fallthru
    _
  // Predicated region
  $region42: #{control_unit_forward.1} parent=0 // pred_check
    _
  $region43: #{control_unit_forward.1} parent=0 // pred_check_branch
    %610 = sbr.rel (0) target = $region45
  $region44: #{control_unit_forward.1} parent=0 // pred_region
    _
  $region45: #{control_unit_forward.1} parent=0 // pred_fallthru
    _

</llo_original>
